<compile_context>
chip_gen: v5e
topology: v5e:2x2
jax: 0.10.0
libtpu: 0.0.40
codegen_flags: <defaults>
</compile_context>

<pallas_src>
import jax
import jax.numpy as jnp
from jax import lax
from jax.experimental import pallas as pl
from jax.experimental.pallas import tpu as pltpu


def loss_cont_spea(LipOutsA, OutsA, LipOutsV, OutsV):
    """JAX/Pallas equivalent of lossCont_Spea.forward (returned value only).

    LipOutsA/LipOutsV: (T, B, C) probability-like tensors. They only feed the
    JS/BCE branch whose result the PyTorch forward discards, so they are not
    touched (halves HBM traffic and removes all log/div EUP work).
    OutsA/OutsV: (B, T, D) feature tensors (f32 or bf16; upcast in-kernel).
    Returns: scalar mean of (cosine_similarity(OutsA, OutsV) + 1) / 2.
    """
    del LipOutsA, LipOutsV  # dead w.r.t. the returned value

    B, T, D = OutsA.shape
    N = B * T

    # Row-slab views (free reshape, no HBM copy).
    a = OutsA.reshape(N, D)
    v = OutsV.reshape(N, D)

    elem_bytes = jnp.dtype(a.dtype).itemsize
    mult = 16 if elem_bytes == 2 else 8          # sublane packing multiple

    # Tile rows from a byte budget: ~2 MiB per input block.
    budget_rows = (2 * 1024 * 1024) // max(1, D * elem_bytes)
    budget_rows = max(mult, (budget_rows // mult) * mult)
    n_rounded = ((N + mult - 1) // mult) * mult  # whole problem, rounded up
    TN = max(mult, min(n_rounded, budget_rows))
    nb = pl.cdiv(N, TN)

    def kernel(a_ref, v_ref, out_ref):
        i = pl.program_id(0)

        @pl.when(i == 0)
        def _():
            out_ref[...] = jnp.zeros_like(out_ref)

        af = a_ref[...].astype(jnp.float32)              # (TN, D)
        vf = v_ref[...].astype(jnp.float32)

        dot = jnp.sum(af * vf, axis=-1, keepdims=True)   # (TN, 1)
        na2 = jnp.sum(af * af, axis=-1, keepdims=True)
        nv2 = jnp.sum(vf * vf, axis=-1, keepdims=True)
        # F.normalize(eps=1e-12) + cosine_similarity(eps=1e-8), fused:
        # for non-degenerate rows this equals <a,v> / (||a||*||v||).
        inv = lax.rsqrt(jnp.maximum(na2, 1e-24)) * lax.rsqrt(jnp.maximum(nv2, 1e-24))
        cos_scaled = (dot * inv + 1.0) * 0.5             # (TN, 1)

        # Mask rows of the ragged last block (Pallas clamps the DMA; the tail
        # of the block is stale VMEM -> select exactly 0.0 for those rows).
        row = i * TN + lax.broadcasted_iota(jnp.int32, (TN, 1), 0)
        cos_scaled = jnp.where(row < N, cos_scaled, 0.0)

        # Output block is resident across the whole grid (same block index
        # every step) -> accumulate directly into it; single writeback at end.
        out_ref[...] += jnp.sum(cos_scaled, keepdims=True)

    partial = pl.pallas_call(
        kernel,
        out_shape=jax.ShapeDtypeStruct((8, 128), jnp.float32),
        grid_spec=pltpu.PrefetchScalarGridSpec(
            num_scalar_prefetch=0,
            grid=(nb,),
            in_specs=[
                pl.BlockSpec((TN, D), lambda i: (i, 0)),
                pl.BlockSpec((TN, D), lambda i: (i, 0)),
            ],
            out_specs=pl.BlockSpec((8, 128), lambda i: (0, 0)),
        ),
        compiler_params=pltpu.CompilerParams(
            dimension_semantics=("arbitrary",)),
    )(a, v)

    # Normalize by the true number of rows.
    return partial[0, 0] / N


if __name__ == "__main__":
    key = jax.random.PRNGKey(0)
    kA, kV, kOA, kOV = jax.random.split(key, 4)

    B, T, C, D = 2, 8, 4, 128

    # Probability-like lip outputs, time-major (T, B, C) as the module expects.
    LipOutsA = jax.nn.softmax(jax.random.normal(kA, (T, B, C)), axis=-1)
    LipOutsV = jax.nn.softmax(jax.random.normal(kV, (T, B, C)), axis=-1)

    OutsA = jax.random.normal(kOA, (B, T, D), dtype=jnp.float32)
    OutsV = jax.random.normal(kOV, (B, T, D), dtype=jnp.float32)

    # Note: the module's projection_A/projection_B/temperature are never used
    # in forward(); they are intentionally not instantiated here.

    out = loss_cont_spea(LipOutsA, OutsA, LipOutsV, OutsV)
    out = jax.block_until_ready(out)

    # Pure-JAX reference of the returned value (normalize -> cosine -> mean).
    def ref(OutsA, OutsV):
        a = OutsA / jnp.maximum(jnp.linalg.norm(OutsA, axis=-1, keepdims=True), 1e-12)
        v = OutsV / jnp.maximum(jnp.linalg.norm(OutsV, axis=-1, keepdims=True), 1e-12)
        cos = jnp.sum(a * v, -1) / jnp.maximum(
            jnp.linalg.norm(a, axis=-1) * jnp.linalg.norm(v, axis=-1), 1e-8)
        return jnp.mean((cos + 1.0) * 0.5)

    assert jnp.allclose(out, ref(OutsA, OutsV), rtol=1e-5, atol=1e-5)
    print("KERNEL_OK")
</pallas_src>

<mosaic_0001>
module attributes {stable_mosaic.version = 11 : i64} {
  func.func @kernel(%arg0: i32, %arg1: memref<16x128xf32, #tpu.memory_space<vmem>>, %arg2: memref<16x128xf32, #tpu.memory_space<vmem>>, %arg3: memref<8x128xf32, #tpu.memory_space<vmem>>) attributes {dimension_semantics = [#tpu.dimension_semantics<arbitrary>], iteration_bounds = array<i64: 1>, scalar_prefetch = 0 : i64, scratch_operands = 0 : i64, tpu.core_type = #tpu.core_type<tc>, window_params = [{transform_indices = @transform_0, window_bounds = array<i64: 16, 128>}, {transform_indices = @transform_1, window_bounds = array<i64: 16, 128>}, {pipeline_mode = #tpu.pipeline_mode<synchronous>, transform_indices = @transform_2, window_bounds = array<i64: 8, 128>}]} {
    %c0_i32 = arith.constant 0 : i32
    %0 = arith.cmpi eq, %arg0, %c0_i32 : i32
    %1 = arith.extui %0 : i1 to i32
    %c0_i32_0 = arith.constant 0 : i32
    %2 = arith.cmpi ne, %1, %c0_i32_0 : i32
    scf.if %2 {
      %cst_17 = arith.constant 0.000000e+00 : f32
      %43 = vector.broadcast %cst_17 : f32 to vector<8x128xf32>
      %c0_18 = arith.constant 0 : index
      %c0_19 = arith.constant 0 : index
      %44 = vector.load %arg3[%c0_18, %c0_19] : memref<8x128xf32, #tpu.memory_space<vmem>>, vector<8x128xf32>
      tpu.vector_store %arg3[%c0_18, %c0_19], %43 {strides = array<i32>} : memref<8x128xf32, #tpu.memory_space<vmem>>, vector<8x128xf32>,
    } else {
    }
    %c0 = arith.constant 0 : index
    %c0_1 = arith.constant 0 : index
    %3 = vector.load %arg1[%c0, %c0_1] : memref<16x128xf32, #tpu.memory_space<vmem>>, vector<16x128xf32>
    %c0_2 = arith.constant 0 : index
    %c0_3 = arith.constant 0 : index
    %4 = vector.load %arg2[%c0_2, %c0_3] : memref<16x128xf32, #tpu.memory_space<vmem>>, vector<16x128xf32>
    %5 = arith.mulf %3, %4 : vector<16x128xf32>
    %cst = arith.constant dense<0.000000e+00> : vector<16xf32>
    %6 = vector.multi_reduction <add>, %5, %cst [1] : vector<16x128xf32> to vector<16xf32>
    %7 = vector.shape_cast %6 : vector<16xf32> to vector<16x1xf32>
    %8 = arith.mulf %3, %3 : vector<16x128xf32>
    %cst_4 = arith.constant dense<0.000000e+00> : vector<16xf32>
    %9 = vector.multi_reduction <add>, %8, %cst_4 [1] : vector<16x128xf32> to vector<16xf32>
    %10 = vector.shape_cast %9 : vector<16xf32> to vector<16x1xf32>
    %11 = arith.mulf %4, %4 : vector<16x128xf32>
    %cst_5 = arith.constant dense<0.000000e+00> : vector<16xf32>
    %12 = vector.multi_reduction <add>, %11, %cst_5 [1] : vector<16x128xf32> to vector<16xf32>
    %13 = vector.shape_cast %12 : vector<16xf32> to vector<16x1xf32>
    %cst_6 = arith.constant 1.000000e-24 : f32
    %14 = vector.broadcast %cst_6 : f32 to vector<16x1xf32>
    %15 = arith.maximumf %10, %14 : vector<16x1xf32>
    %16 = math.rsqrt %15 : vector<16x1xf32>
    %cst_7 = arith.constant 1.000000e-24 : f32
    %17 = vector.broadcast %cst_7 : f32 to vector<16x1xf32>
    %18 = arith.maximumf %13, %17 : vector<16x1xf32>
    %19 = math.rsqrt %18 : vector<16x1xf32>
    %20 = arith.mulf %16, %19 : vector<16x1xf32>
    %21 = arith.mulf %7, %20 : vector<16x1xf32>
    %cst_8 = arith.constant 1.000000e+00 : f32
    %22 = vector.broadcast %cst_8 : f32 to vector<16x1xf32>
    %23 = arith.addf %21, %22 : vector<16x1xf32>
    %cst_9 = arith.constant 5.000000e-01 : f32
    %24 = vector.broadcast %cst_9 : f32 to vector<16x1xf32>
    %25 = arith.mulf %23, %24 : vector<16x1xf32>
    %c16_i32 = arith.constant 16 : i32
    %26 = arith.muli %arg0, %c16_i32 : i32
    %27 = tpu.iota {dimensions = array<i32: 0>} : vector<16x1xi32>
    %28 = vector.broadcast %26 : i32 to vector<16x1xi32>
    %29 = arith.addi %28, %27 : vector<16x1xi32>
    %c16_i32_10 = arith.constant 16 : i32
    %30 = vector.broadcast %c16_i32_10 : i32 to vector<16x1xi32>
    %31 = arith.cmpi slt, %29, %30 : vector<16x1xi32>
    %cst_11 = arith.constant 0.000000e+00 : f32
    %32 = vector.broadcast %cst_11 : f32 to vector<16x1xf32>
    %33 = arith.select %31, %25, %32 : vector<16x1xi1>, vector<16x1xf32>
    %c0_12 = arith.constant 0 : index
    %c0_13 = arith.constant 0 : index
    %34 = vector.load %arg3[%c0_12, %c0_13] : memref<8x128xf32, #tpu.memory_space<vmem>>, vector<8x128xf32>
    %35 = vector.shape_cast %33 : vector<16x1xf32> to vector<1x16x1xf32>
    %cst_14 = arith.constant dense<0.000000e+00> : vector<1xf32>
    %36 = vector.multi_reduction <add>, %35, %cst_14 [1, 2] : vector<1x16x1xf32> to vector<1xf32>
    %37 = vector.shape_cast %36 : vector<1xf32> to vector<1x1x1xf32>
    %38 = vector.extract %37[0, 0, 0] : f32 from vector<1x1x1xf32>
    %39 = vector.broadcast %38 : f32 to vector<1x1xf32>
    %40 = vector.broadcast %39 : vector<1x1xf32> to vector<8x128xf32>
    %41 = arith.addf %34, %40 : vector<8x128xf32>
    %c0_15 = arith.constant 0 : index
    %c0_16 = arith.constant 0 : index
    %42 = vector.load %arg3[%c0_15, %c0_16] : memref<8x128xf32, #tpu.memory_space<vmem>>, vector<8x128xf32>
    tpu.vector_store %arg3[%c0_15, %c0_16], %41 {strides = array<i32>} : memref<8x128xf32, #tpu.memory_space<vmem>>, vector<8x128xf32>,
    return
  }
  func.func @transform_0(%arg0: i32) -> (i32, i32) {
    %c0_i32 = arith.constant 0 : i32
    %c0_i32_0 = arith.constant 0 : i32
    return %arg0, %c0_i32 : i32, i32
  }
  func.func @transform_1(%arg0: i32) -> (i32, i32) {
    %c0_i32 = arith.constant 0 : i32
    %c0_i32_0 = arith.constant 0 : i32
    return %arg0, %c0_i32 : i32, i32
  }
  func.func @transform_2(%arg0: i32) -> (i32, i32) {
    %c0_i32 = arith.constant 0 : i32
    %c0_i32_0 = arith.constant 0 : i32
    %c0_i32_1 = arith.constant 0 : i32
    return %c0_i32, %c0_i32_0 : i32, i32
  }
}

</mosaic_0001>

<llo_original>
// kernel: tpu_custom_call.1
$region0: #{tpu_custom_call.1}
  #allocation0 [shape = 'u32[]', space=smem, size = 0x4, offset = 0x4, fixed_abs, tag = 'smem constant byte address 0x4 - core index']
  #allocation1 [shape = 'u32[72,128]{1,0:T(1,128)}', space=vmem, size = 0x9000, scoped, tag = 'internal scratch']
  %s0 = inlined_call_operand.hbm [shape: f32[16,128], index: 0, kind: input, shape index: {}]
  %s1 = inlined_call_operand.hbm [shape: f32[16,128], index: 1, kind: input, shape index: {}]
  %s2 = inlined_call_operand.hbm [shape: f32[8,128], index: 2, kind: output, shape index: {}]
  %s3 = sld [smem:[#allocation0]]
  $region30: #{tpu_custom_call.1} parent=0
    _
  %s5 = ssub.s32 1, %s3
  %s6 = scalar_select 0, %s5, %s3
  $region1: #{tpu_custom_call.1} parent=0
    #allocation2 [shape = 'u8[8192]{0}', space=vmem, size = 0x2000, scoped, tag = 'input window, operand 0, single buffered']
    #allocation3 [shape = 's32[1]{0}', space=sflag, size = 0x4, scoped, tag = 'scoped memory for tpu_custom_call.1']
    #allocation4 [shape = 's32[1]{0}', space=sflag, size = 0x4, scoped, tag = 'scoped memory for tpu_custom_call.1']
    #allocation5 [shape = 'u8[8192]{0}', space=vmem, size = 0x2000, scoped, tag = 'input window, operand 1, single buffered']
    #allocation6 [shape = 's32[1]{0}', space=sflag, size = 0x4, scoped, tag = 'scoped memory for tpu_custom_call.1']
    #allocation7 [shape = 'u8[4096]{0}', space=vmem, size = 0x1000, scoped, tag = 'output window, operand 0, single buffered']
    %7 = vsyncpa [#allocation3], 0
    %8 = vsyncpa [#allocation6], 0
    %9 = vsyncpa [#allocation4], 0
    // Predicated region
    $region2: #{tpu_custom_call.1} parent=1 // pred_check
      _
    $region3: #{tpu_custom_call.1} parent=1 // pred_check_branch
      %11 = sbr.rel (0) target = $region5
    $region4: #{tpu_custom_call.1} parent=1 // pred_region
      %13 = vsyncadd [#allocation3], 0
      %s14 = sshll.u32 %s0, 4
      %s15 = int_to_ptr.hbm [resolvable:$true] %s14
      %s16 = sshll.u32 [#allocation2], 4
      %s17 = int_to_ptr.vmem [resolvable:$true] %s16
      %22 = dma.hbm_to_vmem [thread:$0]  %s15, 256, %s17, [#allocation3], 128, 128, 8
    $region5: #{tpu_custom_call.1} parent=1 // pred_fallthru
      _
    // Predicated region
    $region6: #{tpu_custom_call.1} parent=1 // pred_check
      _
    $region7: #{tpu_custom_call.1} parent=1 // pred_check_branch
      %24 = sbr.rel (0) target = $region9
    $region8: #{tpu_custom_call.1} parent=1 // pred_region
      %26 = vsyncadd [#allocation6], 0
      %s27 = sshll.u32 %s1, 4
      %s28 = int_to_ptr.hbm [resolvable:$true] %s27
      %s29 = sshll.u32 [#allocation5], 4
      %s30 = int_to_ptr.vmem [resolvable:$true] %s29
      %35 = dma.hbm_to_vmem [thread:$0]  %s28, 256, %s30, [#allocation6], 128, 128, 8
    $region9: #{tpu_custom_call.1} parent=1 // pred_fallthru
      _
    // Predicated region
    $region10: #{tpu_custom_call.1} parent=1 // pred_check
      _
    $region11: #{tpu_custom_call.1} parent=1 // pred_check_branch
      %37 = sbr.rel (0) target = $region13
    $region12: #{tpu_custom_call.1} parent=1 // pred_region
      %39 = dma.done [#allocation3], 256
    $region13: #{tpu_custom_call.1} parent=1 // pred_fallthru
      _
    // Predicated region
    $region14: #{tpu_custom_call.1} parent=1 // pred_check
      _
    $region15: #{tpu_custom_call.1} parent=1 // pred_check_branch
      %41 = sbr.rel (0) target = $region17
    $region16: #{tpu_custom_call.1} parent=1 // pred_region
      %43 = dma.done [#allocation6], 256
    $region17: #{tpu_custom_call.1} parent=1 // pred_fallthru
      _
    %p44 = scmp.eq.s32.totalorder 0, 0
    // Predicated region
    $region18: #{tpu_custom_call.1} parent=1 // pred_check
      %p45 = pneg %p44
    $region19: #{tpu_custom_call.1} parent=1 // pred_check_branch
      %47 = sbr.rel (%p45) target = $region21
    $region20: #{tpu_custom_call.1} parent=1 // pred_region
      %48 = vst [vmem:[#allocation7] sm:$0xff] 0.0
    $region21: #{tpu_custom_call.1} parent=1 // pred_fallthru
      _
    %v49 = vld [vmem:[#allocation2] sm:$0xff]
    %v50 = vld [vmem:[#allocation2 + $0x8] sm:$0xff]
    %v51 = vld [vmem:[#allocation5] sm:$0xff]
    %v52 = vld [vmem:[#allocation5 + $0x8] sm:$0xff]
    %v53 = vmul.f32 %v49, %v51
    %v54 = vmul.f32 %v50, %v52
    %55 = vadd.xlane.f32.xlu0 %v53
    %v56 = vpop.xlane.xlu0 %55
    %57 = vadd.xlane.f32.xlu0 %v54
    %v58 = vpop.xlane.xlu0 %57
    %v59 = vmul.f32 %v49, %v49
    %v60 = vmul.f32 %v50, %v50
    %61 = vadd.xlane.f32.xlu0 %v59
    %v62 = vpop.xlane.xlu0 %61
    %63 = vadd.xlane.f32.xlu0 %v60
    %v64 = vpop.xlane.xlu0 %63
    %v65 = vmul.f32 %v51, %v51
    %v66 = vmul.f32 %v52, %v52
    %67 = vadd.xlane.f32.xlu0 %v65
    %v68 = vpop.xlane.xlu0 %67
    %69 = vadd.xlane.f32.xlu0 %v66
    %v70 = vpop.xlane.xlu0 %69
    %v71 = vmax.f32 %v62, 1e-24
    %v72 = vmax.f32 %v64, 1e-24
    %v73 = vrsqrt.pop %v71
    %v74 = vmul.f32 %v73, %v71
    %v75 = vmul.f32 %v74, %v73
    %v76 = vmul.f32 0.5, %v75
    %v77 = vsub.f32 1.5, %v76
    %v78 = vmul.f32 %v73, %v77
    %vm79 = vweird.f32 %v71
    %vm80 = vweird.f32 %v73
    %vm81 = vmor %vm79, %vm80
    %v82 = vsel %vm81, %v73, %v78
    %v83 = vrsqrt.pop %v72
    %v84 = vmul.f32 %v83, %v72
    %v85 = vmul.f32 %v84, %v83
    %v86 = vmul.f32 0.5, %v85
    %v87 = vsub.f32 1.5, %v86
    %v88 = vmul.f32 %v83, %v87
    %vm89 = vweird.f32 %v72
    %vm90 = vweird.f32 %v83
    %vm91 = vmor %vm89, %vm90
    %v92 = vsel %vm91, %v83, %v88
    %v93 = vmax.f32 %v68, 1e-24
    %v94 = vmax.f32 %v70, 1e-24
    %v95 = vrsqrt.pop %v93
    %v96 = vmul.f32 %v95, %v93
    %v97 = vmul.f32 %v96, %v95
    %v98 = vmul.f32 0.5, %v97
    %v99 = vsub.f32 1.5, %v98
    %v100 = vmul.f32 %v95, %v99
    %vm101 = vweird.f32 %v93
    %vm102 = vweird.f32 %v95
    %vm103 = vmor %vm101, %vm102
    %v104 = vsel %vm103, %v95, %v100
    %v105 = vrsqrt.pop %v94
    %v106 = vmul.f32 %v105, %v94
    %v107 = vmul.f32 %v106, %v105
    %v108 = vmul.f32 0.5, %v107
    %v109 = vsub.f32 1.5, %v108
    %v110 = vmul.f32 %v105, %v109
    %vm111 = vweird.f32 %v94
    %vm112 = vweird.f32 %v105
    %vm113 = vmor %vm111, %vm112
    %v114 = vsel %vm113, %v105, %v110
    %v115 = vmul.f32 %v82, %v104
    %v116 = vmul.f32 %v92, %v114
    %v117 = vmul.f32 %v56, %v115
    %v118 = vmul.f32 %v58, %v116
    %v119 = vadd.f32 %v117, 1.0
    %v120 = vadd.f32 %v118, 1.0
    %v121 = vmul.f32 %v119, 0.5
    %v122 = vmul.f32 %v120, 0.5
    %s123 = smul.u32 0, 16
    %v124 = vlaneseq
    %v125 = vshrl.u32 %v124, 7
    %v126 = vadd.s32 %v125, 8
    %v127 = vstv %s123
    %v128 = vadd.s32 %v127, %v125
    %v129 = vadd.s32 %v127, %v126
    %vm130 = vcmp.lt.s32.totalorder %v128, 16
    %vm131 = vcmp.lt.s32.totalorder %v129, 16
    %v132 = vsel %vm130, %v121, 0.0
    %v133 = vsel %vm131, %v122, 0.0
    %v134 = vld [vmem:[#allocation7] sm:$0xff]
    %vm135 = vcmask 7168
    %v136 = vsel %vm135, %v132, 0.0
    %v137 = vsel %vm135, %v133, 0.0
    %v138 = vadd.f32 %v136, %v137
    %139 = vadd.xlane.f32.xlu0 %v138
    %v140 = vpop.xlane.xlu0 %139
    %v141 = vrot.slane %v140, 4
    %v142 = vadd.f32 %v140, %v141
    %v143 = vrot.slane %v142, 2
    %v144 = vadd.f32 %v142, %v143
    %v145 = vrot.slane %v144, 1
    %v146 = vadd.f32 %v144, %v145
    %s147 = vtos %v146
    %v148 = vstv %s147
    %v149 = vadd.f32 %v134, %v148
    %150 = vst [vmem:[#allocation7] sm:$0xff] %v149
    // Predicated region
    $region22: #{tpu_custom_call.1} parent=1 // pred_check
      _
    $region23: #{tpu_custom_call.1} parent=1 // pred_check_branch
      %152 = sbr.rel (0) target = $region25
    $region24: #{tpu_custom_call.1} parent=1 // pred_region
      %154 = vsyncadd [#allocation4], 0
      %s156 = sshll.u32 [#allocation7], 4
      %s157 = int_to_ptr.vmem [resolvable:$true] %s156
      %s158 = sshll.u32 %s2, 4
      %s159 = int_to_ptr.hbm [resolvable:$true] %s158
      %161 = dma.vmem_to_hbm [thread:$0]  %s157, 128, %s159, [#allocation4]
    $region25: #{tpu_custom_call.1} parent=1 // pred_fallthru
      _
    // Predicated region
    $region26: #{tpu_custom_call.1} parent=1 // pred_check
      _
    $region27: #{tpu_custom_call.1} parent=1 // pred_check_branch
      %163 = sbr.rel (0) target = $region29
    $region28: #{tpu_custom_call.1} parent=1 // pred_region
      %165 = dma.done [#allocation4], 128
    $region29: #{tpu_custom_call.1} parent=1 // pred_fallthru
      _
    %166 = vsyncpa [#allocation3], 1
    %167 = vsyncpa [#allocation6], 1
    %168 = vsyncpa [#allocation4], 1

</llo_original>
